<compile_context>
chip_gen: v7x
topology: tpu7x:2x2x1
jax: 0.10.0
libtpu: 0.0.40
codegen_flags: <defaults>
</compile_context>

<pallas_src>
import jax
import jax.numpy as jnp
import numpy as np
from jax.experimental import pallas as pl
from jax.experimental.pallas import tpu as pltpu


def limit_clause_kernel(vq_ref, d2_ref, bias_ref, w1t_ref, w3_ref, out_ref):
    """One grid step == TB batch elements.

    vq_ref:   (TB, Lp, H)  bf16  V_Q tile (H on the lane axis)
    d2_ref:   (TB, H)      f32   precomputed dense2(v_P) rows (hoisted matmul)
    bias_ref: (TB, Lp)     f32   additive query mask (0 keep / -1e9 masked/pad)
    w1t_ref:  (H, H)       bf16  dense1.weight.T (resident, constant index_map)
    w3_ref:   (1, H)       f32   dense3.weight row
    out_ref:  (TB, Lp)     f32   softmax over L of the pointer logits (lane-dense)
    """
    TB, Lp, H = vq_ref.shape

    # dense1 over all TB*Lp rows at once: bf16 MXU matmul, f32 accumulation.
    # Lp is a multiple of 16 (bf16 sublane pack) -> the reshapes are layout no-ops.
    vq = vq_ref[...].reshape(TB * Lp, H)
    d1 = jnp.dot(vq, w1t_ref[...], preferred_element_type=jnp.float32)    # (TB*Lp, H)
    d1 = d1.reshape(TB, Lp, H)

    # Add the hoisted dense2(v_P) row per batch element; tanh runs on the EUP.
    t = jnp.tanh(d1 + d2_ref[...][:, None, :])                            # (TB, Lp, H) f32

    # dense3 as VPU broadcast-mul + XLU lane reduce -> lane-dense (TB, Lp).
    d3 = jnp.sum(t * w3_ref[...], axis=-1)                                # (TB, Lp)

    # masked_fill as a fused additive bias, then a stable softmax over L (lanes).
    d3 = d3 + bias_ref[...]
    d3 = d3 - jnp.max(d3, axis=-1, keepdims=True)
    e = jnp.exp(d3)
    inv = pl.reciprocal(jnp.sum(e, axis=-1, keepdims=True), approx=True)  # EUP
    out_ref[...] = (e * inv).astype(out_ref.dtype)


def _pick_batch_tile(B, Lp, H, row_tile, vmem_cap):
    """Choose TB (batch elements per grid step) and estimate VMEM usage."""

    def vmem_estimate(tb):
        block_in = tb * Lp * H * 2 + tb * H * 4 + tb * Lp * 4   # vq + d2 + bias (1 buffer)
        block_out = tb * Lp * 4
        weights = H * H * 2 + H * 4                             # w1t bf16 + w3 f32
        scratch = 2 * tb * Lp * H * 4                           # f32 d1 / tanh intermediates
        # 2x: double-buffered I/O blocks AND possibly double-buffered weights.
        return 2 * (block_in + block_out + weights) + scratch + (1 << 20)

    tb = max(1, row_tile // Lp)
    if B > 1:
        tb = min(tb, -(-B // 2))     # keep >= 2 grid steps so both v7x TCs get work
    tb = min(tb, B)
    while tb > 1 and vmem_estimate(tb) > vmem_cap:
        tb //= 2
    if tb < B and tb % 8 != 0:       # partial-batch 2-D blocks need sublane-aligned TB
        tb = (tb // 8) * 8
        tb = B if tb == 0 else tb
    tb = min(tb, B)
    return tb, vmem_estimate(tb)


def limit_clause_forward(V_Q, v_P, v_S, q_mask, params, labels=None, *, row_tile=2048):
    """Pallas implementation of LimitClause.forward (inference path).

    Returns (loss, ((softmax(top1), None), (softmax(d3), None))).
    """
    B, L, H = V_Q.shape
    f32 = jnp.float32
    bf16 = jnp.bfloat16

    # ---- tiny heads hoisted to plain JAX: 1-row matmuls waste the MXU per grid
    #      step and would pin an extra (H, H) weight + top1 params in VMEM ----
    top1_logits = (v_S.astype(f32) @ params["top1_w"].astype(f32).T
                   + params["top1_b"].astype(f32))                        # (B, 2)
    top1_probs = jax.nn.softmax(top1_logits, axis=-1)
    d2 = v_P.astype(f32) @ params["dense2_w"].astype(f32).T               # (B, H)

    # TODO(synk): CrossEntropyLoss(ignore_index=...) training path not implemented;
    # labels=None inference path returns loss = 0 as in the reference module.
    loss = jnp.float32(0.0)

    if H % 128 != 0:
        # H is the lane / MXU-contraction axis.  For non-128-multiple H the kernel
        # cannot beat fused XLA (lane + MXU under-utilization); use plain JAX.
        d1 = V_Q.astype(f32) @ params["dense1_w"].astype(f32).T
        d3 = jnp.tanh(d1 + d2[:, None, :]) @ params["dense3_w"].astype(f32).T
        d3 = jnp.where(q_mask == 0, -1.0e9, d3[..., 0])
        d3_probs = jax.nn.softmax(d3, axis=-1)
        return loss, ((top1_probs, None), (d3_probs, None))

    # ---- query mask as an additive bias; pad L up to the bf16 sublane pack (16)
    #      so the in-kernel (TB, Lp, H) <-> (TB*Lp, H) reshapes are free ----
    Lp = ((L + 15) // 16) * 16
    bias = jnp.where(q_mask == 0, -1.0e9, 0.0).astype(f32)                # (B, L)
    vq = V_Q
    if Lp != L:
        bias = jnp.pad(bias, ((0, 0), (0, Lp - L)), constant_values=-1.0e9)
        vq = jnp.pad(vq, ((0, 0), (0, Lp - L), (0, 0)))
    vq = vq.astype(bf16)                                                  # bf16: MXU-native, halves HBM traffic

    w1t = params["dense1_w"].astype(bf16).T                               # (H, H)
    w3 = params["dense3_w"].astype(f32).reshape(1, H)                     # (1, H)

    # ---- batch tile: ~row_tile rows per MXU matmul, >=2 grid steps when possible,
    #      shrunk until the VMEM budget (48 MiB, safe on v5e/v6e/v7x) fits ----
    VMEM_CAP = 48 << 20
    TB, vmem_est = _pick_batch_tile(B, Lp, H, row_tile, VMEM_CAP)
    num_tiles = pl.cdiv(B, TB)
    vmem_limit = int(min(VMEM_CAP, max(2 << 20, vmem_est)))

    grid_spec = pltpu.PrefetchScalarGridSpec(
        num_scalar_prefetch=0,
        grid=(num_tiles,),
        in_specs=[
            pl.BlockSpec((TB, Lp, H), lambda i: (i, 0, 0)),   # V_Q tile (bf16)
            pl.BlockSpec((TB, H), lambda i: (i, 0)),          # dense2(v_P) rows
            pl.BlockSpec((TB, Lp), lambda i: (i, 0)),         # additive mask bias
            pl.BlockSpec((H, H), lambda i: (0, 0)),           # dense1.W^T (bf16)
            pl.BlockSpec((1, H), lambda i: (0, 0)),           # dense3.W row (f32)
        ],
        out_specs=pl.BlockSpec((TB, Lp), lambda i: (i, 0)),   # lane-dense output
    )

    cost = pl.CostEstimate(
        flops=2 * B * Lp * H * H + 4 * B * Lp * H,
        transcendentals=B * Lp * H + 2 * B * Lp,
        bytes_accessed=(B * Lp * H * 2 + B * H * 4 + B * Lp * 4
                        + H * H * 2 + H * 4 + B * Lp * 4),
    )

    d3_probs = pl.pallas_call(
        limit_clause_kernel,
        out_shape=jax.ShapeDtypeStruct((B, Lp), f32),
        grid_spec=grid_spec,
        compiler_params=pltpu.CompilerParams(
            dimension_semantics=("parallel",),   # batch-tile axis shards across TCs on v7x
            vmem_limit_bytes=vmem_limit),
        cost_estimate=cost,
    )(vq, d2, bias, w1t, w3)

    d3_probs = d3_probs[:, :L]
    preds = ((top1_probs, None), (d3_probs, None))
    return loss, preds


def reference_forward(V_Q, v_P, v_S, q_mask, params):
    """Pure-JAX reference mirroring the PyTorch forward (labels=None)."""
    top1 = v_S @ params["top1_w"].T + params["top1_b"]
    d1 = V_Q @ params["dense1_w"].T
    d2 = v_P @ params["dense2_w"].T
    d3 = jnp.tanh(d1 + d2[:, None, :]) @ params["dense3_w"].T  # (B, L, 1)
    d3 = d3[..., 0]
    d3 = jnp.where(q_mask == 0, -1.0e9, d3)
    return jax.nn.softmax(top1, axis=-1), jax.nn.softmax(d3, axis=-1)


def _make_inputs(key, B, L, H):
    ks = jax.random.split(key, 8)
    params = {
        "top1_w": jax.random.normal(ks[0], (2, H), jnp.float32) * 0.1,
        "top1_b": jax.random.normal(ks[1], (2,), jnp.float32) * 0.1,
        "dense1_w": jax.random.normal(ks[2], (H, H), jnp.float32) * 0.1,
        "dense2_w": jax.random.normal(ks[3], (H, H), jnp.float32) * 0.1,
        "dense3_w": jax.random.normal(ks[4], (1, H), jnp.float32) * 0.1,
    }
    V_Q = jax.random.normal(ks[5], (B, L, H), jnp.float32)
    v_P = jax.random.normal(ks[6], (B, H), jnp.float32)
    v_S = jax.random.normal(ks[7], (B, H), jnp.float32)
    q_mask = (jnp.ones((B, L), jnp.int32)
              .at[1, L - 2:].set(0)
              .at[3, :3].set(0)
              .at[B - 1, 1:4].set(0))
    return params, V_Q, v_P, v_S, q_mask


if __name__ == "__main__":
    # Kernel path: B=16, L=8, hidden=128 (128-lane aligned).  With the default
    # row_tile the batch tile is capped at ceil(B/2)=8 -> grid=(2,), exercising
    # the multi-step batch-tiled pipeline (and both TCs on v7x).
    B, L, H = 16, 8, 128
    params, V_Q, v_P, v_S, q_mask = _make_inputs(jax.random.PRNGKey(0), B, L, H)

    loss, ((top1_p, _), (d3_p, _)) = limit_clause_forward(
        V_Q, v_P, v_S, q_mask, params, labels=None)
    jax.block_until_ready((loss, top1_p, d3_p))

    ref_top1, ref_d3 = reference_forward(V_Q, v_P, v_S, q_mask, params)
    # top1 head is computed in f32 plain JAX -> tight tolerance.
    np.testing.assert_allclose(np.asarray(top1_p), np.asarray(ref_top1),
                               rtol=1e-5, atol=1e-5)
    # pointer head uses bf16 MXU inputs (f32 accumulation) + approx reciprocal
    # in the softmax -> looser tolerance.
    np.testing.assert_allclose(np.asarray(d3_p), np.asarray(ref_d3),
                               rtol=2e-2, atol=2e-2)

    # Small-H fallback path (H % 128 != 0 -> plain-JAX pointer head), cheap coverage.
    Bs, Ls, Hs = 4, 8, 32
    params_s, V_Qs, v_Ps, v_Ss, q_ms = _make_inputs(jax.random.PRNGKey(1), Bs, Ls, Hs)
    _, ((t_s, _), (d_s, _)) = limit_clause_forward(V_Qs, v_Ps, v_Ss, q_ms, params_s)
    jax.block_until_ready((t_s, d_s))
    rt_s, rd_s = reference_forward(V_Qs, v_Ps, v_Ss, q_ms, params_s)
    np.testing.assert_allclose(np.asarray(t_s), np.asarray(rt_s), rtol=1e-5, atol=1e-5)
    np.testing.assert_allclose(np.asarray(d_s), np.asarray(rd_s), rtol=1e-5, atol=1e-5)

    print("KERNEL_OK")
</pallas_src>

<mosaic_0001>
module attributes {stable_mosaic.version = 11 : i64} {
  func.func @limit_clause_kernel(%arg0: i32, %arg1: memref<8x16x128xbf16, #tpu.memory_space<vmem>>, %arg2: memref<8x128xf32, #tpu.memory_space<vmem>>, %arg3: memref<8x16xf32, #tpu.memory_space<vmem>>, %arg4: memref<128x128xbf16, #tpu.memory_space<vmem>>, %arg5: memref<1x128xf32, #tpu.memory_space<vmem>>, %arg6: memref<8x16xf32, #tpu.memory_space<vmem>>) attributes {dimension_semantics = [#tpu.dimension_semantics<parallel>], iteration_bounds = array<i64: 2>, scalar_prefetch = 0 : i64, scratch_operands = 0 : i64, tpu.core_type = #tpu.core_type<tc>, window_params = [{transform_indices = @transform_0, window_bounds = array<i64: 8, 16, 128>}, {transform_indices = @transform_1, window_bounds = array<i64: 8, 128>}, {transform_indices = @transform_2, window_bounds = array<i64: 8, 16>}, {pipeline_mode = #tpu.pipeline_mode<synchronous>, transform_indices = @transform_3, window_bounds = array<i64: 128, 128>}, {pipeline_mode = #tpu.pipeline_mode<synchronous>, transform_indices = @transform_4, window_bounds = array<i64: 1, 128>}, {transform_indices = @transform_5, window_bounds = array<i64: 8, 16>}]} {
    %c0 = arith.constant 0 : index
    %c0_0 = arith.constant 0 : index
    %c0_1 = arith.constant 0 : index
    %0 = vector.load %arg1[%c0, %c0_0, %c0_1] : memref<8x16x128xbf16, #tpu.memory_space<vmem>>, vector<8x16x128xbf16>
    %1 = vector.shape_cast %0 : vector<8x16x128xbf16> to vector<128x128xbf16>
    %c0_2 = arith.constant 0 : index
    %c0_3 = arith.constant 0 : index
    %2 = vector.load %arg4[%c0_2, %c0_3] : memref<128x128xbf16, #tpu.memory_space<vmem>>, vector<128x128xbf16>
    %cst = arith.constant dense<0.000000e+00> : vector<128x128xf32>
    %3 = tpu.matmul %1, %2, %cst {dimension_numbers = #tpu.dot_dimension_numbers<[1], [0], [0], [1], [0, 0, 1, 1], [], []>} : vector<128x128xbf16>, vector<128x128xbf16>, vector<128x128xf32> -> vector<128x128xf32>
    %4 = vector.shape_cast %3 : vector<128x128xf32> to vector<8x16x128xf32>
    %c0_4 = arith.constant 0 : index
    %c0_5 = arith.constant 0 : index
    %5 = vector.load %arg2[%c0_4, %c0_5] : memref<8x128xf32, #tpu.memory_space<vmem>>, vector<8x128xf32>
    %6 = vector.shape_cast %5 : vector<8x128xf32> to vector<8x1x128xf32>
    %7 = vector.broadcast %6 : vector<8x1x128xf32> to vector<8x16x128xf32>
    %8 = arith.addf %4, %7 : vector<8x16x128xf32>
    %9 = math.tanh %8 : vector<8x16x128xf32>
    %c0_6 = arith.constant 0 : index
    %c0_7 = arith.constant 0 : index
    %10 = vector.load %arg5[%c0_6, %c0_7] : memref<1x128xf32, #tpu.memory_space<vmem>>, vector<1x128xf32>
    %11 = vector.shape_cast %10 : vector<1x128xf32> to vector<1x1x128xf32>
    %12 = vector.broadcast %11 : vector<1x1x128xf32> to vector<8x16x128xf32>
    %13 = arith.mulf %9, %12 : vector<8x16x128xf32>
    %cst_8 = arith.constant dense<0.000000e+00> : vector<8x16xf32>
    %14 = vector.multi_reduction <add>, %13, %cst_8 [2] : vector<8x16x128xf32> to vector<8x16xf32>
    %c0_9 = arith.constant 0 : index
    %c0_10 = arith.constant 0 : index
    %15 = vector.load %arg3[%c0_9, %c0_10] : memref<8x16xf32, #tpu.memory_space<vmem>>, vector<8x16xf32>
    %16 = arith.addf %14, %15 : vector<8x16xf32>
    %cst_11 = arith.constant dense<0xFF800000> : vector<8xf32>
    %17 = vector.multi_reduction <maximumf>, %16, %cst_11 [1] : vector<8x16xf32> to vector<8xf32>
    %18 = vector.shape_cast %17 : vector<8xf32> to vector<8x1xf32>
    %19 = vector.broadcast %18 : vector<8x1xf32> to vector<8x16xf32>
    %20 = arith.subf %16, %19 : vector<8x16xf32>
    %21 = math.exp %20 : vector<8x16xf32>
    %cst_12 = arith.constant dense<0.000000e+00> : vector<8xf32>
    %22 = vector.multi_reduction <add>, %21, %cst_12 [1] : vector<8x16xf32> to vector<8xf32>
    %23 = vector.shape_cast %22 : vector<8xf32> to vector<8x1xf32>
    %24 = tpu.reciprocal %23 {approx = true} : vector<8x1xf32> -> vector<8x1xf32>
    %25 = vector.broadcast %24 : vector<8x1xf32> to vector<8x16xf32>
    %26 = arith.mulf %21, %25 : vector<8x16xf32>
    %c0_13 = arith.constant 0 : index
    %c0_14 = arith.constant 0 : index
    %27 = vector.load %arg6[%c0_13, %c0_14] : memref<8x16xf32, #tpu.memory_space<vmem>>, vector<8x16xf32>
    tpu.vector_store %arg6[%c0_13, %c0_14], %26 {strides = array<i32>} : memref<8x16xf32, #tpu.memory_space<vmem>>, vector<8x16xf32>,
    return
  }
  func.func @transform_0(%arg0: i32) -> (i32, i32, i32) {
    %c0_i32 = arith.constant 0 : i32
    %c0_i32_0 = arith.constant 0 : i32
    %c0_i32_1 = arith.constant 0 : i32
    return %arg0, %c0_i32, %c0_i32_0 : i32, i32, i32
  }
  func.func @transform_1(%arg0: i32) -> (i32, i32) {
    %c0_i32 = arith.constant 0 : i32
    %c0_i32_0 = arith.constant 0 : i32
    return %arg0, %c0_i32 : i32, i32
  }
  func.func @transform_2(%arg0: i32) -> (i32, i32) {
    %c0_i32 = arith.constant 0 : i32
    %c0_i32_0 = arith.constant 0 : i32
    return %arg0, %c0_i32 : i32, i32
  }
  func.func @transform_3(%arg0: i32) -> (i32, i32) {
    %c0_i32 = arith.constant 0 : i32
    %c0_i32_0 = arith.constant 0 : i32
    %c0_i32_1 = arith.constant 0 : i32
    return %c0_i32, %c0_i32_0 : i32, i32
  }
  func.func @transform_4(%arg0: i32) -> (i32, i32) {
    %c0_i32 = arith.constant 0 : i32
    %c0_i32_0 = arith.constant 0 : i32
    %c0_i32_1 = arith.constant 0 : i32
    return %c0_i32, %c0_i32_0 : i32, i32
  }
  func.func @transform_5(%arg0: i32) -> (i32, i32) {
    %c0_i32 = arith.constant 0 : i32
    %c0_i32_0 = arith.constant 0 : i32
    return %arg0, %c0_i32 : i32, i32
  }
}

</mosaic_0001>

<llo_original>
// kernel: tpu_custom_call.1
$region0: #{tpu_custom_call.1}
  #allocation0 [shape = 'u32[]', space=smem, size = 0x4, offset = 0x4, fixed_abs, tag = 'smem constant byte address 0x4 - core index']
  #allocation1 [shape = 'u32[144,128]{1,0:T(1,128)}', space=vmem, size = 0x12000, scoped, tag = 'internal scratch']
  %s0 = inlined_call_operand.hbm [shape: bf16[16,16,128], index: 0, kind: input, shape index: {}]
  %s1 = inlined_call_operand.hbm [shape: f32[16,128], index: 1, kind: input, shape index: {}]
  %s2 = inlined_call_operand.hbm [shape: f32[16,16], index: 2, kind: input, shape index: {}]
  %s3 = inlined_call_operand.hbm [shape: bf16[128,128], index: 3, kind: input, shape index: {}]
  %s4 = inlined_call_operand.vmem [shape: f32[1,128], index: 4, kind: input, shape index: {}]
  %s5 = inlined_call_operand.hbm [shape: f32[16,16], index: 5, kind: output, shape index: {}]
  %s6 = sld [smem:[#allocation0]]
  $region69: #{tpu_custom_call.1} parent=0
    _
  %s8 = ssub.s32 1, %s6
  %s9 = scalar_select 0, %s8, %s6
  $region1: #{tpu_custom_call.1} parent=0
    #allocation2 [shape = 'u8[65536]{0}', space=vmem, size = 0x10000, scoped, tag = 'input window, operand 0']
    #allocation3 [shape = 's32[2]{0}', space=sflag, size = 0x8, scoped, tag = 'scoped memory for tpu_custom_call.1']
    #allocation4 [shape = 's32[2]{0}', space=sflag, size = 0x8, scoped, tag = 'scoped memory for tpu_custom_call.1']
    #allocation5 [shape = 'u8[8192]{0}', space=vmem, size = 0x2000, scoped, tag = 'input window, operand 1']
    #allocation6 [shape = 's32[2]{0}', space=sflag, size = 0x8, scoped, tag = 'scoped memory for tpu_custom_call.1']
    #allocation7 [shape = 'u8[8192]{0}', space=vmem, size = 0x2000, scoped, tag = 'input window, operand 2']
    #allocation8 [shape = 'u8[32768]{0}', space=vmem, size = 0x8000, scoped, tag = 'input window, operand 3, single buffered']
    #allocation9 [shape = 's32[1]{0}', space=sflag, size = 0x4, scoped, tag = 'scoped memory for tpu_custom_call.1']
    #allocation10 [shape = 'u8[8192]{0}', space=vmem, size = 0x2000, scoped, tag = 'output window, operand 0']
    %10 = vsyncpa [#allocation3], 0
    %s11 = scalar_lea.sflag [#allocation3], 1
    %12 = vsyncpa %s11, 0
    %13 = vsyncpa [#allocation6], 0
    %s14 = scalar_lea.sflag [#allocation6], 1
    %15 = vsyncpa %s14, 0
    %16 = vsyncpa [#allocation9], 0
    %17 = vsyncpa [#allocation4], 0
    %s18 = scalar_lea.sflag [#allocation4], 1
    %19 = vsyncpa %s18, 0
    loop: start=0, step=1, limit=4
    $region2: #{tpu_custom_call.1} parent=1 // loop_pre_header
      _
    $region3: #{tpu_custom_call.1} parent=1 // loop_header
      %s21 = sphi 0, %s25
      %p22 = scmp.ge.s32.totalorder %s21, 4
      %s31 = sphi 0, %s33
      %s34 = sphi 0, %s31
      %s35 = sphi 0, %s34
      %s51 = sphi 0, %s35
      %s57 = sphi 0, %s59
      %s60 = sphi 0, %s57
      %s61 = sphi 0, %s60
      %s77 = sphi 0, %s61
      %s83 = sphi 0, %s85
      %s86 = sphi 0, %s83
      %s87 = sphi 0, %s86
      %s103 = sphi 0, %s87
      %s107 = sphi 0, %s107
      %s109 = sphi 0, %s107
      %s110 = sphi 0, %s109
      %s124 = sphi 0, %s110
      %s128 = sphi 0, %s128
      %s130 = sphi 0, %s128
      %s131 = sphi 0, %s130
      %s145 = sphi 0, %s131
      %s151 = sphi 0, %s153
      %s154 = sphi 0, %s151
      %s155 = sphi 0, %s154
      %s171 = sphi 0, %s155
    $region4: #{tpu_custom_call.1} parent=1 // loop_header_branch
      %24 = sbr.rel (%p22) target = $region8
    $region5: #{tpu_custom_call.1} parent=1 // loop_body
      %s26 = ssub.s32 %s21, 1
      %s27 = ssub.s32 %s21, 2
      %s28 = sadd.s32 %s21, 1
      %s29 = ssub.s32 %s21, %s28
      %p30 = scmp.eq.s32.totalorder %s29, 0
      %s32 = sadd.s32 %s31, 1
      %s33 = scalar_select %p30, %s31, %s32
      %p36 = pneg %p30
      %p37 = scmp.eq.s32.totalorder %s21, 1
      %p38 = por %p36, %p37
      %p39 = scmp.ne.s32.totalorder %s31, %s34
      %p40 = scmp.eq.s32.totalorder %s21, 0
      %p41 = por %p39, %p40
      %p42 = scmp.ne.s32.totalorder %s31, %s34
      %p43 = scmp.eq.s32.totalorder %s26, 1
      %p44 = por %p42, %p43
      %p45 = scmp.ne.s32.totalorder %s34, %s35
      %p46 = scmp.eq.s32.totalorder %s26, 0
      %p47 = por %p45, %p46
      %p48 = scmp.ne.s32.totalorder %s34, %s35
      %p49 = scmp.eq.s32.totalorder %s27, 1
      %p50 = por %p48, %p49
      %p52 = scmp.ne.s32.totalorder %s35, %s51
      %p53 = scmp.eq.s32.totalorder %s27, 0
      %p54 = por %p52, %p53
      %s55 = ssub.s32 %s21, %s28
      %p56 = scmp.eq.s32.totalorder %s55, 0
      %s58 = sadd.s32 %s57, 1
      %s59 = scalar_select %p56, %s57, %s58
      %p62 = pneg %p56
      %p63 = scmp.eq.s32.totalorder %s21, 1
      %p64 = por %p62, %p63
      %p65 = scmp.ne.s32.totalorder %s57, %s60
      %p66 = scmp.eq.s32.totalorder %s21, 0
      %p67 = por %p65, %p66
      %p68 = scmp.ne.s32.totalorder %s57, %s60
      %p69 = scmp.eq.s32.totalorder %s26, 1
      %p70 = por %p68, %p69
      %p71 = scmp.ne.s32.totalorder %s60, %s61
      %p72 = scmp.eq.s32.totalorder %s26, 0
      %p73 = por %p71, %p72
      %p74 = scmp.ne.s32.totalorder %s60, %s61
      %p75 = scmp.eq.s32.totalorder %s27, 1
      %p76 = por %p74, %p75
      %p78 = scmp.ne.s32.totalorder %s61, %s77
      %p79 = scmp.eq.s32.totalorder %s27, 0
      %p80 = por %p78, %p79
      %s81 = ssub.s32 %s21, %s28
      %p82 = scmp.eq.s32.totalorder %s81, 0
      %s84 = sadd.s32 %s83, 1
      %s85 = scalar_select %p82, %s83, %s84
      %p88 = pneg %p82
      %p89 = scmp.eq.s32.totalorder %s21, 1
      %p90 = por %p88, %p89
      %p91 = scmp.ne.s32.totalorder %s83, %s86
      %p92 = scmp.eq.s32.totalorder %s21, 0
      %p93 = por %p91, %p92
      %p94 = scmp.ne.s32.totalorder %s83, %s86
      %p95 = scmp.eq.s32.totalorder %s26, 1
      %p96 = por %p94, %p95
      %p97 = scmp.ne.s32.totalorder %s86, %s87
      %p98 = scmp.eq.s32.totalorder %s26, 0
      %p99 = por %p97, %p98
      %p100 = scmp.ne.s32.totalorder %s86, %s87
      %p101 = scmp.eq.s32.totalorder %s27, 1
      %p102 = por %p100, %p101
      %p104 = scmp.ne.s32.totalorder %s87, %s103
      %p105 = scmp.eq.s32.totalorder %s27, 0
      %p106 = por %p104, %p105
      %s108 = sadd.s32 %s107, 1
      %p111 = scmp.eq.s32.totalorder %s21, 1
      %p112 = scmp.ne.s32.totalorder %s107, %s109
      %p113 = scmp.eq.s32.totalorder %s21, 0
      %p114 = por %p112, %p113
      %p115 = scmp.ne.s32.totalorder %s107, %s109
      %p116 = scmp.eq.s32.totalorder %s26, 1
      %p117 = por %p115, %p116
      %p118 = scmp.ne.s32.totalorder %s109, %s110
      %p119 = scmp.eq.s32.totalorder %s26, 0
      %p120 = por %p118, %p119
      %p121 = scmp.ne.s32.totalorder %s109, %s110
      %p122 = scmp.eq.s32.totalorder %s27, 1
      %p123 = por %p121, %p122
      %p125 = scmp.ne.s32.totalorder %s110, %s124
      %p126 = scmp.eq.s32.totalorder %s27, 0
      %p127 = por %p125, %p126
      %s129 = sadd.s32 %s128, 1
      %p132 = scmp.eq.s32.totalorder %s21, 1
      %p133 = scmp.ne.s32.totalorder %s128, %s130
      %p134 = scmp.eq.s32.totalorder %s21, 0
      %p135 = por %p133, %p134
      %p136 = scmp.ne.s32.totalorder %s128, %s130
      %p137 = scmp.eq.s32.totalorder %s26, 1
      %p138 = por %p136, %p137
      %p139 = scmp.ne.s32.totalorder %s130, %s131
      %p140 = scmp.eq.s32.totalorder %s26, 0
      %p141 = por %p139, %p140
      %p142 = scmp.ne.s32.totalorder %s130, %s131
      %p143 = scmp.eq.s32.totalorder %s27, 1
      %p144 = por %p142, %p143
      %p146 = scmp.ne.s32.totalorder %s131, %s145
      %p147 = scmp.eq.s32.totalorder %s27, 0
      %p148 = por %p146, %p147
      %s149 = ssub.s32 %s21, %s28
      %p150 = scmp.eq.s32.totalorder %s149, 0
      %s152 = sadd.s32 %s151, 1
      %s153 = scalar_select %p150, %s151, %s152
      %p156 = pneg %p150
      %p157 = scmp.eq.s32.totalorder %s21, 1
      %p158 = por %p156, %p157
      %p159 = scmp.ne.s32.totalorder %s151, %s154
      %p160 = scmp.eq.s32.totalorder %s21, 0
      %p161 = por %p159, %p160
      %p162 = scmp.ne.s32.totalorder %s151, %s154
      %p163 = scmp.eq.s32.totalorder %s26, 1
      %p164 = por %p162, %p163
      %p165 = scmp.ne.s32.totalorder %s154, %s155
      %p166 = scmp.eq.s32.totalorder %s26, 0
      %p167 = por %p165, %p166
      %p168 = scmp.ne.s32.totalorder %s154, %s155
      %p169 = scmp.eq.s32.totalorder %s27, 1
      %p170 = por %p168, %p169
      %p172 = scmp.ne.s32.totalorder %s155, %s171
      %p173 = scmp.eq.s32.totalorder %s27, 0
      %p174 = por %p172, %p173
      %p175 = scmp.le.s32.totalorder 1, %s21
      %p176 = scmp.lt.s32.totalorder %s21, 3
      %p177 = pnand %p175, %p176
      %p178 = pneg %p177
      // Predicated region
      $region9: #{tpu_custom_call.1} parent=5 // pred_check
        _
      $region10: #{tpu_custom_call.1} parent=5 // pred_check_branch
        %180 = sbr.rel (%p177) target = $region12
      $region11: #{tpu_custom_call.1} parent=5 // pred_region
        %s181 = ssub.s32 %s21, 1
        // Predicated region
        $region13: #{tpu_custom_call.1} parent=11 // pred_check
          %p182 = pneg %p120
        $region14: #{tpu_custom_call.1} parent=11 // pred_check_branch
          %184 = sbr.rel (%p182) target = $region16
        $region15: #{tpu_custom_call.1} parent=11 // pred_region
          %s186 = ssub.s32 1024, 1024
          %187 = vsyncadd [#allocation9], %s186
          %s188 = sshll.u32 [#allocation8], 4
          %s189 = int_to_ptr.vmem [resolvable:$true] %s188
          %194 = dma.hbm_to_vmem [thread:$0]  %s3, 1024, %s189, [#allocation9], 64, 64, 4
        $region16: #{tpu_custom_call.1} parent=11 // pred_fallthru
          _
        // Predicated region
        $region17: #{tpu_custom_call.1} parent=11 // pred_check
          %p195 = pneg %p141
        $region18: #{tpu_custom_call.1} parent=11 // pred_check_branch
          %197 = sbr.rel (%p195) target = $region20
        $region19: #{tpu_custom_call.1} parent=11 // pred_region
          _
        $region20: #{tpu_custom_call.1} parent=11 // pred_fallthru
          _
      $region12: #{tpu_custom_call.1} parent=5 // pred_fallthru
        _
      %p198 = scmp.lt.s32.totalorder %s21, 2
      // Predicated region
      $region21: #{tpu_custom_call.1} parent=5 // pred_check
        %p199 = pneg %p198
      $region22: #{tpu_custom_call.1} parent=5 // pred_check_branch
        %201 = sbr.rel (%p199) target = $region24
      $region23: #{tpu_custom_call.1} parent=5 // pred_region
        // Predicated region
        $region25: #{tpu_custom_call.1} parent=23 // pred_check
          %p202 = pneg %p41
        $region26: #{tpu_custom_call.1} parent=23 // pred_check_branch
          %204 = sbr.rel (%p202) target = $region28
        $region27: #{tpu_custom_call.1} parent=23 // pred_region
          %s205 = sand.u32 %s31, 1
          %s206 = scalar_lea.sflag [#allocation3], %s205
          %s207 = sand.u32 %s31, 1
          %s208 = smul.addr %s207, 64
          %s209 = scalar_lea.vmem [#allocation2], %s208
          %s210 = smul.u32 8, %s21
          %s212 = ssub.s32 1024, 1024
          %213 = vsyncadd %s206, %s212
          %s214 = smul.addr %s210, 2
          %s215 = smul.addr %s214, 64
          %s216 = scalar_lea.hbm %s0, %s215
          %s217 = sshll.u32 %s209, 4
          %s218 = int_to_ptr.vmem [resolvable:$true] %s217
          %223 = dma.hbm_to_vmem [thread:$0]  %s216, 1024, %s218, %s206, 64, 64, 4
        $region28: #{tpu_custom_call.1} parent=23 // pred_fallthru
          _
        // Predicated region
        $region29: #{tpu_custom_call.1} parent=23 // pred_check
          %p224 = pneg %p67
        $region30: #{tpu_custom_call.1} parent=23 // pred_check_branch
          %226 = sbr.rel (%p224) target = $region32
        $region31: #{tpu_custom_call.1} parent=23 // pred_region
          %s227 = sand.u32 %s21, 1
          %s228 = scalar_lea.sflag [#allocation6], %s227
          %s229 = sand.u32 %s57, 1
          %s230 = smul.addr %s229, 8
          %s231 = scalar_lea.vmem [#allocation5], %s230
          %s233 = ssub.s32 128, 128
          %234 = vsyncadd %s228, %s233
          %s235 = smul.addr %s21, 128
          %s236 = scalar_lea.hbm %s1, %s235
          %s238 = sshll.u32 %s231, 4
          %s239 = int_to_ptr.vmem [resolvable:$true] %s238
          %241 = dma.hbm_to_vmem [thread:$0]  %s236, 128, %s239, %s228
        $region32: #{tpu_custom_call.1} parent=23 // pred_fallthru
          _
        // Predicated region
        $region33: #{tpu_custom_call.1} parent=23 // pred_check
          %p242 = pneg %p93
        $region34: #{tpu_custom_call.1} parent=23 // pred_check_branch
          %244 = sbr.rel (%p242) target = $region36
        $region35: #{tpu_custom_call.1} parent=23 // pred_region
          %s245 = sand.u32 %s21, 1
          %s246 = scalar_lea.sflag [#allocation6], %s245
          %s247 = sand.u32 %s83, 1
          %s248 = smul.addr %s247, 8
          %s249 = scalar_lea.vmem [#allocation7], %s248
          %s251 = ssub.s32 128, 128
          %252 = vsyncadd %s246, %s251
          %s253 = smul.addr %s21, 128
          %s254 = scalar_lea.hbm %s2, %s253
          %s256 = sshll.u32 %s249, 4
          %s257 = int_to_ptr.vmem [resolvable:$true] %s256
          %259 = dma.hbm_to_vmem [thread:$0]  %s254, 128, %s257, %s246
        $region36: #{tpu_custom_call.1} parent=23 // pred_fallthru
          _
      $region24: #{tpu_custom_call.1} parent=5 // pred_fallthru
        _
      %p260 = scmp.le.s32.totalorder 1, %s21
      %p261 = scmp.lt.s32.totalorder %s21, 3
      %p262 = pnand %p260, %p261
      %p263 = pneg %p262
      // Predicated region
      $region37: #{tpu_custom_call.1} parent=5 // pred_check
        _
      $region38: #{tpu_custom_call.1} parent=5 // pred_check_branch
        %265 = sbr.rel (%p262) target = $region40
      $region39: #{tpu_custom_call.1} parent=5 // pred_region
        %s266 = ssub.s32 %s21, 1
        %s267 = sand.u32 %s34, 1
        %s268 = scalar_lea.sflag [#allocation3], %s267
        %s269 = sand.u32 %s34, 1
        %s270 = smul.addr %s269, 64
        %s271 = scalar_lea.vmem [#allocation2], %s270
        // Predicated region
        $region41: #{tpu_custom_call.1} parent=39 // pred_check
          %p272 = pneg %p47
        $region42: #{tpu_custom_call.1} parent=39 // pred_check_branch
          %274 = sbr.rel (%p272) target = $region44
        $region43: #{tpu_custom_call.1} parent=39 // pred_region
          %275 = dma.done %s268, 1024
        $region44: #{tpu_custom_call.1} parent=39 // pred_fallthru
          _
        %s276 = sand.u32 %s26, 1
        %s277 = scalar_lea.sflag [#allocation6], %s276
        %s278 = sand.u32 %s60, 1
        %s279 = smul.addr %s278, 8
        %s280 = scalar_lea.vmem [#allocation5], %s279
        // Predicated region
        $region45: #{tpu_custom_call.1} parent=39 // pred_check
          %p281 = pneg %p73
        $region46: #{tpu_custom_call.1} parent=39 // pred_check_branch
          %283 = sbr.rel (%p281) target = $region48
        $region47: #{tpu_custom_call.1} parent=39 // pred_region
          %284 = dma.done %s277, 128
        $region48: #{tpu_custom_call.1} parent=39 // pred_fallthru
          _
        %s285 = sand.u32 %s26, 1
        %s286 = scalar_lea.sflag [#allocation6], %s285
        %s287 = sand.u32 %s86, 1
        %s288 = smul.addr %s287, 8
        %s289 = scalar_lea.vmem [#allocation7], %s288
        // Predicated region
        $region49: #{tpu_custom_call.1} parent=39 // pred_check
          %p290 = pneg %p99
        $region50: #{tpu_custom_call.1} parent=39 // pred_check_branch
          %292 = sbr.rel (%p290) target = $region52
        $region51: #{tpu_custom_call.1} parent=39 // pred_region
          %293 = dma.done %s286, 128
        $region52: #{tpu_custom_call.1} parent=39 // pred_fallthru
          _
        // Predicated region
        $region53: #{tpu_custom_call.1} parent=39 // pred_check
          %p294 = pneg %p120
        $region54: #{tpu_custom_call.1} parent=39 // pred_check_branch
          %296 = sbr.rel (%p294) target = $region56
        $region55: #{tpu_custom_call.1} parent=39 // pred_region
          %297 = dma.done [#allocation9], 1024
        $region56: #{tpu_custom_call.1} parent=39 // pred_fallthru
          _
        %s298 = sand.u32 %s34, 1
        %s299 = scalar_lea.sflag [#allocation3], %s298
        %s300 = sand.u32 %s34, 1
        %s301 = smul.addr %s300, 64
        %s302 = scalar_lea.vmem [#allocation2], %s301
        %p303 = pneg %p47
        %p304 = pneg %p44
        %s305 = sand.u32 %s26, 1
        %s306 = scalar_lea.sflag [#allocation6], %s305
        %s307 = sand.u32 %s60, 1
        %s308 = smul.addr %s307, 8
        %s309 = scalar_lea.vmem [#allocation5], %s308
        %p310 = pneg %p73
        %p311 = pneg %p70
        %s312 = sand.u32 %s26, 1
        %s313 = scalar_lea.sflag [#allocation6], %s312
        %s314 = sand.u32 %s86, 1
        %s315 = smul.addr %s314, 8
        %s316 = scalar_lea.vmem [#allocation7], %s315
        %p317 = pneg %p99
        %p318 = pneg %p96
        %p319 = pneg %p120
        %p320 = pneg %p117
        %p321 = pneg %p141
        %p322 = pneg %p138
        %p323 = pneg %p167
        %p324 = pneg %p164
        %s325 = sand.u32 %s154, 1
        %s326 = scalar_lea.sflag [#allocation4], %s325
        %s327 = sand.u32 %s154, 1
        %s328 = smul.addr %s327, 8
        %s329 = scalar_lea.vmem [#allocation10], %s328
        %s330 = smul.u32 8, %s26
        %v332 = vld [vmem:[%s271] sm:$0xf]
        %v333 = vld [vmem:[%s271 + $0x4] sm:$0xf]
        %v334 = vld [vmem:[%s271 + $0x8] sm:$0xf]
        %v335 = vld [vmem:[%s271 + $0xc] sm:$0xf]
        %v336 = vld [vmem:[%s271 + $0x10] sm:$0xf]
        %v337 = vld [vmem:[%s271 + $0x14] sm:$0xf]
        %v338 = vld [vmem:[%s271 + $0x18] sm:$0xf]
        %v339 = vld [vmem:[%s271 + $0x1c] sm:$0xf]
        %v340 = vld [vmem:[%s271 + $0x20] sm:$0xf]
        %v341 = vld [vmem:[%s271 + $0x24] sm:$0xf]
        %v342 = vld [vmem:[%s271 + $0x28] sm:$0xf]
        %v343 = vld [vmem:[%s271 + $0x2c] sm:$0xf]
        %v344 = vld [vmem:[%s271 + $0x30] sm:$0xf]
        %v345 = vld [vmem:[%s271 + $0x34] sm:$0xf]
        %v346 = vld [vmem:[%s271 + $0x38] sm:$0xf]
        %v347 = vld [vmem:[%s271 + $0x3c] sm:$0xf]
        %v348 = vld [vmem:[#allocation8] sm:$0xf]
        %v349 = vld [vmem:[#allocation8 + $0x4] sm:$0xf]
        %v350 = vld [vmem:[#allocation8 + $0x8] sm:$0xf]
        %v351 = vld [vmem:[#allocation8 + $0xc] sm:$0xf]
        %v352 = vld [vmem:[#allocation8 + $0x10] sm:$0xf]
        %v353 = vld [vmem:[#allocation8 + $0x14] sm:$0xf]
        %v354 = vld [vmem:[#allocation8 + $0x18] sm:$0xf]
        %v355 = vld [vmem:[#allocation8 + $0x1c] sm:$0xf]
        %v356 = vld [vmem:[#allocation8 + $0x20] sm:$0xf]
        %v357 = vld [vmem:[#allocation8 + $0x24] sm:$0xf]
        %v358 = vld [vmem:[#allocation8 + $0x28] sm:$0xf]
        %v359 = vld [vmem:[#allocation8 + $0x2c] sm:$0xf]
        %v360 = vld [vmem:[#allocation8 + $0x30] sm:$0xf]
        %v361 = vld [vmem:[#allocation8 + $0x34] sm:$0xf]
        %v362 = vld [vmem:[#allocation8 + $0x38] sm:$0xf]
        %v363 = vld [vmem:[#allocation8 + $0x3c] sm:$0xf]
        %v380 = vunpack.c.l.b16 %v332
        %v381 = vunpack.c.l.b16 %v333
        %v382 = vunpack.c.l.b16 %v334
        %v383 = vunpack.c.l.b16 %v335
        %v384 = vunpack.c.l.b16 %v336
        %v385 = vunpack.c.l.b16 %v337
        %v386 = vunpack.c.l.b16 %v338
        %v387 = vunpack.c.l.b16 %v339
        %v388 = vunpack.c.l.b16 %v340
        %v389 = vunpack.c.l.b16 %v341
        %v390 = vunpack.c.l.b16 %v342
        %v391 = vunpack.c.l.b16 %v343
        %v392 = vunpack.c.l.b16 %v344
        %v393 = vunpack.c.l.b16 %v345
        %v394 = vunpack.c.l.b16 %v346
        %v395 = vunpack.c.l.b16 %v347
        %v396 = vpack.c.b16 %v381, %v380
        %v397 = vpack.c.b16 %v383, %v382
        %v398 = vpack.c.b16 %v385, %v384
        %v399 = vpack.c.b16 %v387, %v386
        %v400 = vpack.c.b16 %v389, %v388
        %v401 = vpack.c.b16 %v391, %v390
        %v402 = vpack.c.b16 %v393, %v392
        %v403 = vpack.c.b16 %v395, %v394
        %v428 = vunpack.c.l.b16 %v348
        %v429 = vunpack.c.l.b16 %v349
        %v430 = vunpack.c.l.b16 %v350
        %v431 = vunpack.c.l.b16 %v351
        %v432 = vunpack.c.l.b16 %v352
        %v433 = vunpack.c.l.b16 %v353
        %v434 = vunpack.c.l.b16 %v354
        %v435 = vunpack.c.l.b16 %v355
        %v436 = vunpack.c.l.b16 %v356
        %v437 = vunpack.c.l.b16 %v357
        %v438 = vunpack.c.l.b16 %v358
        %v439 = vunpack.c.l.b16 %v359
        %v440 = vunpack.c.l.b16 %v360
        %v441 = vunpack.c.l.b16 %v361
        %v442 = vunpack.c.l.b16 %v362
        %v443 = vunpack.c.l.b16 %v363
        %v444 = vpack.c.b16 %v429, %v428
        %v445 = vpack.c.b16 %v431, %v430
        %v446 = vpack.c.b16 %v433, %v432
        %v447 = vpack.c.b16 %v435, %v434
        %v448 = vpack.c.b16 %v437, %v436
        %v449 = vpack.c.b16 %v439, %v438
        %v450 = vpack.c.b16 %v441, %v440
        %v451 = vpack.c.b16 %v443, %v442
        %460 = vmatprep.subr.bf16.mxu0 0
        %461 = vmatpush1.bf16.msra.mxu0 %v444
        %462 = vmatprep.subr.bf16.mxu0 0
        %463 = vmatpush1.bf16.msra.mxu0 %v445
        %464 = vmatprep.subr.bf16.mxu0 0
        %465 = vmatpush1.bf16.msra.mxu0 %v446
        %466 = vmatprep.subr.bf16.mxu0 0
        %467 = vmatpush1.bf16.msra.mxu0 %v447
        %468 = vmatprep.subr.bf16.mxu0 0
        %469 = vmatpush1.bf16.msra.mxu0 %v448
        %470 = vmatprep.subr.bf16.mxu0 0
        %471 = vmatpush1.bf16.msra.mxu0 %v449
        %472 = vmatprep.subr.bf16.mxu0 0
        %473 = vmatpush1.bf16.msra.mxu0 %v450
        %474 = vmatprep.subr.bf16.mxu0 0
        %475 = vmatpush1.bf16.msra.mxu0 %v451
        %476 = vmatprep.subr.bf16.mxu0 0
        %477 = vmatpush1.bf16.msra.mxu0 0
        %478 = vmatprep.subr.bf16.mxu0 0
        %479 = vmatpush1.bf16.msra.mxu0 0
        %480 = vmatprep.subr.bf16.mxu0 0
        %481 = vmatpush1.bf16.msra.mxu0 0
        %482 = vmatprep.subr.bf16.mxu0 0
        %483 = vmatpush1.bf16.msra.mxu0 0
        %484 = vmatprep.subr.bf16.mxu0 0
        %485 = vmatpush1.bf16.msra.mxu0 0
        %486 = vmatprep.subr.bf16.mxu0 0
        %487 = vmatpush1.bf16.msra.mxu0 0
        %488 = vmatprep.subr.bf16.mxu0 0
        %489 = vmatpush1.bf16.msra.mxu0 0
        %490 = vmatprep.subr.bf16.mxu0 0
        %491 = vmatpush1.bf16.msra.mxu0 0
        %492 = vmatprep.mubr.bf16.mxu0 0
        %493 = vmatmul.mubr.bf16.gmra.mrb[0].mxu0 %v396
        %v494 = vpop.f32.mrb[0].mxu0
        %v495 = vadd.f32 0.0, %v494
        %v496 = vpop.f32.mrb[0].mxu0
        %v497 = vpop.f32.mrb[0].mxu0
        %v498 = vadd.f32 0.0, %v497
        %v499 = vpop.f32.mrb[0].mxu0
        %500 = vmatprep.mubr.bf16.mxu0 0
        %501 = vmatmul.mubr.bf16.gmra.mrb[0].mxu0 %v397
        %v502 = vpop.f32.mrb[0].mxu0
        %v503 = vadd.f32 0.0, %v502
        %v504 = vpop.f32.mrb[0].mxu0
        %v505 = vpop.f32.mrb[0].mxu0
        %v506 = vadd.f32 0.0, %v505
        %v507 = vpop.f32.mrb[0].mxu0
        %508 = vmatprep.mubr.bf16.mxu0 0
        %509 = vmatmul.mubr.bf16.gmra.mrb[0].mxu0 %v398
        %v510 = vpop.f32.mrb[0].mxu0
        %v511 = vadd.f32 0.0, %v510
        %v512 = vpop.f32.mrb[0].mxu0
        %v513 = vpop.f32.mrb[0].mxu0
        %v514 = vadd.f32 0.0, %v513
        %v515 = vpop.f32.mrb[0].mxu0
        %516 = vmatprep.mubr.bf16.mxu0 0
        %517 = vmatmul.mubr.bf16.gmra.mrb[0].mxu0 %v399
        %v518 = vpop.f32.mrb[0].mxu0
        %v519 = vadd.f32 0.0, %v518
        %v520 = vpop.f32.mrb[0].mxu0
        %v521 = vpop.f32.mrb[0].mxu0
        %v522 = vadd.f32 0.0, %v521
        %v523 = vpop.f32.mrb[0].mxu0
        %524 = vmatprep.mubr.bf16.mxu0 0
        %525 = vmatmul.mubr.bf16.gmra.mrb[0].mxu0 %v400
        %v526 = vpop.f32.mrb[0].mxu0
        %v527 = vadd.f32 0.0, %v526
        %v528 = vpop.f32.mrb[0].mxu0
        %v529 = vpop.f32.mrb[0].mxu0
        %v530 = vadd.f32 0.0, %v529
        %v531 = vpop.f32.mrb[0].mxu0
        %532 = vmatprep.mubr.bf16.mxu0 0
        %533 = vmatmul.mubr.bf16.gmra.mrb[0].mxu0 %v401
        %v534 = vpop.f32.mrb[0].mxu0
        %v535 = vadd.f32 0.0, %v534
        %v536 = vpop.f32.mrb[0].mxu0
        %v537 = vpop.f32.mrb[0].mxu0
        %v538 = vadd.f32 0.0, %v537
        %v539 = vpop.f32.mrb[0].mxu0
        %540 = vmatprep.mubr.bf16.mxu0 0
        %541 = vmatmul.mubr.bf16.gmra.mrb[0].mxu0 %v402
        %v542 = vpop.f32.mrb[0].mxu0
        %v543 = vadd.f32 0.0, %v542
        %v544 = vpop.f32.mrb[0].mxu0
        %v545 = vpop.f32.mrb[0].mxu0
        %v546 = vadd.f32 0.0, %v545
        %v547 = vpop.f32.mrb[0].mxu0
        %548 = vmatprep.mubr.bf16.mxu0 0
        %549 = vmatmul.mubr.bf16.gmra.mrb[0].mxu0 %v403
        %v550 = vpop.f32.mrb[0].mxu0
        %v551 = vadd.f32 0.0, %v550
        %v552 = vpop.f32.mrb[0].mxu0
        %v553 = vpop.f32.mrb[0].mxu0
        %v554 = vadd.f32 0.0, %v553
        %v555 = vpop.f32.mrb[0].mxu0
        %556 = vdwg.mxu0
        %v557 = vld [vmem:[%s280] sm:$0xff]
        %v559 = vcombine.high %v557, %v557
        %v561 = vunpack.c.l.s4 1966171168
        %v562 = vunpack.c.0.s8 %v561
        %v563 = vlaneseq
        %v564 = vshrl.u32 %v563, 7
        %v565 = vsub.s32 %v562, %v564
        %v566 = vrot.slane %v557, %v565
        %v568 = vunpack.c.l.s4 1966171168
        %v569 = vunpack.c.0.s8 %v568
        %v570 = vlaneseq
        %v571 = vshrl.u32 %v570, 7
        %v572 = vsub.s32 %v569, %v571
        %v573 = vrot.slane %v559, %v572
        %v574 = vcombine.high %v566, %v566
        %v575 = vcombine.high %v573, %v573
        %v577 = vunpack.c.l.s4 1966171168
        %v578 = vunpack.c.0.s8 %v577
        %v579 = vlaneseq
        %v580 = vshrl.u32 %v579, 7
        %v581 = vsub.s32 %v578, %v580
        %v582 = vrot.slane %v566, %v581
        %v584 = vunpack.c.l.s4 1966171168
        %v585 = vunpack.c.0.s8 %v584
        %v586 = vlaneseq
        %v587 = vshrl.u32 %v586, 7
        %v588 = vsub.s32 %v585, %v587
        %v589 = vrot.slane %v573, %v588
        %v591 = vunpack.c.l.s4 1966171168
        %v592 = vunpack.c.0.s8 %v591
        %v593 = vlaneseq
        %v594 = vshrl.u32 %v593, 7
        %v595 = vsub.s32 %v592, %v594
        %v596 = vrot.slane %v574, %v595
        %v598 = vunpack.c.l.s4 1966171168
        %v599 = vunpack.c.0.s8 %v598
        %v600 = vlaneseq
        %v601 = vshrl.u32 %v600, 7
        %v602 = vsub.s32 %v599, %v601
        %v603 = vrot.slane %v575, %v602
        %v604 = vcombine.high %v582, %v582
        %v605 = vcombine.high %v589, %v589
        %v606 = vcombine.high %v596, %v596
        %v607 = vcombine.high %v603, %v603
        %v608 = vlaneseq
        %v609 = vshrl.u32 %v608, 7
        %v610 = vsub.s32 0, %v609
        %v611 = vrot.slane %v582, %v610
        %v612 = vlaneseq
        %v613 = vshrl.u32 %v612, 7
        %v614 = vsub.s32 0, %v613
        %v615 = vrot.slane %v596, %v614
        %v616 = vlaneseq
        %v617 = vshrl.u32 %v616, 7
        %v618 = vsub.s32 0, %v617
        %v619 = vrot.slane %v604, %v618
        %v620 = vlaneseq
        %v621 = vshrl.u32 %v620, 7
        %v622 = vsub.s32 0, %v621
        %v623 = vrot.slane %v606, %v622
        %v624 = vlaneseq
        %v625 = vshrl.u32 %v624, 7
        %v626 = vsub.s32 0, %v625
        %v627 = vrot.slane %v589, %v626
        %v628 = vlaneseq
        %v629 = vshrl.u32 %v628, 7
        %v630 = vsub.s32 0, %v629
        %v631 = vrot.slane %v603, %v630
        %v632 = vlaneseq
        %v633 = vshrl.u32 %v632, 7
        %v634 = vsub.s32 0, %v633
        %v635 = vrot.slane %v605, %v634
        %v636 = vlaneseq
        %v637 = vshrl.u32 %v636, 7
        %v638 = vsub.s32 0, %v637
        %v639 = vrot.slane %v607, %v638
        %v648 = vadd.f32 %v495, %v611
        %v649 = vadd.f32 %v498, %v611
        %v650 = vadd.f32 %v503, %v615
        %v651 = vadd.f32 %v506, %v615
        %v652 = vadd.f32 %v511, %v619
        %v653 = vadd.f32 %v514, %v619
        %v654 = vadd.f32 %v519, %v623
        %v655 = vadd.f32 %v522, %v623
        %v656 = vadd.f32 %v527, %v627
        %v657 = vadd.f32 %v530, %v627
        %v658 = vadd.f32 %v535, %v631
        %v659 = vadd.f32 %v538, %v631
        %v660 = vadd.f32 %v543, %v635
        %v661 = vadd.f32 %v546, %v635
        %v662 = vadd.f32 %v551, %v639
        %v663 = vadd.f32 %v554, %v639
        %v664 = vtanh.pop %v648
        %v665 = vtanh.pop %v649
        %v666 = vtanh.pop %v650
        %v667 = vtanh.pop %v651
        %v668 = vtanh.pop %v652
        %v669 = vtanh.pop %v653
        %v670 = vtanh.pop %v654
        %v671 = vtanh.pop %v655
        %v672 = vtanh.pop %v656
        %v673 = vtanh.pop %v657
        %v674 = vtanh.pop %v658
        %v675 = vtanh.pop %v659
        %v676 = vtanh.pop %v660
        %v677 = vtanh.pop %v661
        %v678 = vtanh.pop %v662
        %v679 = vtanh.pop %v663
        %v680 = vld [vmem:[%s4] sm:$0x1]
        %v682 = vlaneseq
        %v683 = vshrl.u32 %v682, 7
        %v684 = vsub.s32 0, %v683
        %v685 = vrot.slane %v680, %v684
        %v687 = vmul.f32 %v664, %v685
        %v688 = vmul.f32 %v665, %v685
        %v689 = vmul.f32 %v666, %v685
        %v690 = vmul.f32 %v667, %v685
        %v691 = vmul.f32 %v668, %v685
        %v692 = vmul.f32 %v669, %v685
        %v693 = vmul.f32 %v670, %v685
        %v694 = vmul.f32 %v671, %v685
        %v695 = vmul.f32 %v672, %v685
        %v696 = vmul.f32 %v673, %v685
        %v697 = vmul.f32 %v674, %v685
        %v698 = vmul.f32 %v675, %v685
        %v699 = vmul.f32 %v676, %v685
        %v700 = vmul.f32 %v677, %v685
        %v701 = vmul.f32 %v678, %v685
        %v702 = vmul.f32 %v679, %v685
        %703 = vadd.xlane.f32.xlu0 %v687
        %v704 = vpop.xlane.xlu0 %703
        %705 = vadd.xlane.f32.xlu0 %v688
        %v706 = vpop.xlane.xlu0 %705
        %707 = vadd.xlane.f32.xlu0 %v689
        %v708 = vpop.xlane.xlu0 %707
        %709 = vadd.xlane.f32.xlu0 %v690
        %v710 = vpop.xlane.xlu0 %709
        %711 = vadd.xlane.f32.xlu0 %v691
        %v712 = vpop.xlane.xlu0 %711
        %713 = vadd.xlane.f32.xlu0 %v692
        %v714 = vpop.xlane.xlu0 %713
        %715 = vadd.xlane.f32.xlu0 %v693
        %v716 = vpop.xlane.xlu0 %715
        %717 = vadd.xlane.f32.xlu0 %v694
        %v718 = vpop.xlane.xlu0 %717
        %719 = vadd.xlane.f32.xlu0 %v695
        %v720 = vpop.xlane.xlu0 %719
        %721 = vadd.xlane.f32.xlu0 %v696
        %v722 = vpop.xlane.xlu0 %721
        %723 = vadd.xlane.f32.xlu0 %v697
        %v724 = vpop.xlane.xlu0 %723
        %725 = vadd.xlane.f32.xlu0 %v698
        %v726 = vpop.xlane.xlu0 %725
        %727 = vadd.xlane.f32.xlu0 %v699
        %v728 = vpop.xlane.xlu0 %727
        %729 = vadd.xlane.f32.xlu0 %v700
        %v730 = vpop.xlane.xlu0 %729
        %731 = vadd.xlane.f32.xlu0 %v701
        %v732 = vpop.xlane.xlu0 %731
        %733 = vadd.xlane.f32.xlu0 %v702
        %v734 = vpop.xlane.xlu0 %733
        %v735 = vld [vmem:[%s289] sm:$0xff]
        %v737 = vlaneseq
        %v738 = vshrl.u32 %v737, 7
        %v739 = vsub.s32 0, %v738
        %v740 = vrot.slane %v735, %v739
        %742 = vbcast.lane.b32.xlu0 %v740, 256
        %v743 = vpop.permute.xlu0 %742
        %s745 = sor.u32 256, 8
        %746 = vbcast.lane.b32.xlu0 %v740, %s745
        %v747 = vpop.permute.xlu0 %746
        %v748 = vlaneseq
        %v749 = vshrl.u32 %v748, 7
        %v750 = vsub.s32 1, %v749
        %v751 = vrot.slane %v735, %v750
        %753 = vbcast.lane.b32.xlu0 %v751, 256
        %v754 = vpop.permute.xlu0 %753
        %s756 = sor.u32 256, 8
        %757 = vbcast.lane.b32.xlu0 %v751, %s756
        %v758 = vpop.permute.xlu0 %757
        %v759 = vlaneseq
        %v760 = vshrl.u32 %v759, 7
        %v761 = vsub.s32 2, %v760
        %v762 = vrot.slane %v735, %v761
        %764 = vbcast.lane.b32.xlu0 %v762, 256
        %v765 = vpop.permute.xlu0 %764
        %s767 = sor.u32 256, 8
        %768 = vbcast.lane.b32.xlu0 %v762, %s767
        %v769 = vpop.permute.xlu0 %768
        %v770 = vlaneseq
        %v771 = vshrl.u32 %v770, 7
        %v772 = vsub.s32 3, %v771
        %v773 = vrot.slane %v735, %v772
        %775 = vbcast.lane.b32.xlu0 %v773, 256
        %v776 = vpop.permute.xlu0 %775
        %s778 = sor.u32 256, 8
        %779 = vbcast.lane.b32.xlu0 %v773, %s778
        %v780 = vpop.permute.xlu0 %779
        %v781 = vlaneseq
        %v782 = vshrl.u32 %v781, 7
        %v783 = vsub.s32 4, %v782
        %v784 = vrot.slane %v735, %v783
        %786 = vbcast.lane.b32.xlu0 %v784, 256
        %v787 = vpop.permute.xlu0 %786
        %s789 = sor.u32 256, 8
        %790 = vbcast.lane.b32.xlu0 %v784, %s789
        %v791 = vpop.permute.xlu0 %790
        %v792 = vlaneseq
        %v793 = vshrl.u32 %v792, 7
        %v794 = vsub.s32 5, %v793
        %v795 = vrot.slane %v735, %v794
        %797 = vbcast.lane.b32.xlu0 %v795, 256
        %v798 = vpop.permute.xlu0 %797
        %s800 = sor.u32 256, 8
        %801 = vbcast.lane.b32.xlu0 %v795, %s800
        %v802 = vpop.permute.xlu0 %801
        %v803 = vlaneseq
        %v804 = vshrl.u32 %v803, 7
        %v805 = vsub.s32 6, %v804
        %v806 = vrot.slane %v735, %v805
        %808 = vbcast.lane.b32.xlu0 %v806, 256
        %v809 = vpop.permute.xlu0 %808
        %s811 = sor.u32 256, 8
        %812 = vbcast.lane.b32.xlu0 %v806, %s811
        %v813 = vpop.permute.xlu0 %812
        %v814 = vlaneseq
        %v815 = vshrl.u32 %v814, 7
        %v816 = vsub.s32 7, %v815
        %v817 = vrot.slane %v735, %v816
        %819 = vbcast.lane.b32.xlu0 %v817, 256
        %v820 = vpop.permute.xlu0 %819
        %s822 = sor.u32 256, 8
        %823 = vbcast.lane.b32.xlu0 %v817, %s822
        %v824 = vpop.permute.xlu0 %823
        %v841 = vadd.f32 %v704, %v743
        %v842 = vadd.f32 %v706, %v747
        %v843 = vadd.f32 %v708, %v754
        %v844 = vadd.f32 %v710, %v758
        %v845 = vadd.f32 %v712, %v765
        %v846 = vadd.f32 %v714, %v769
        %v847 = vadd.f32 %v716, %v776
        %v848 = vadd.f32 %v718, %v780
        %v849 = vadd.f32 %v720, %v787
        %v850 = vadd.f32 %v722, %v791
        %v851 = vadd.f32 %v724, %v798
        %v852 = vadd.f32 %v726, %v802
        %v853 = vadd.f32 %v728, %v809
        %v854 = vadd.f32 %v730, %v813
        %v855 = vadd.f32 %v732, %v820
        %v856 = vadd.f32 %v734, %v824
        %873 = vset.pattern.permute.xlu0 0
        %874 = vperm.xlu0 %873, %v841
        %v875 = vpop.permute.xlu0 %874
        %876 = vset.pattern.permute.xlu0 0
        %877 = vperm.xlu0 %876, %v842
        %v878 = vpop.permute.xlu0 %877
        %879 = vset.pattern.permute.xlu0 0
        %880 = vperm.xlu0 %879, %v843
        %v881 = vpop.permute.xlu0 %880
        %882 = vset.pattern.permute.xlu0 0
        %883 = vperm.xlu0 %882, %v844
        %v884 = vpop.permute.xlu0 %883
        %885 = vset.pattern.permute.xlu0 0
        %886 = vperm.xlu0 %885, %v845
        %v887 = vpop.permute.xlu0 %886
        %888 = vset.pattern.permute.xlu0 0
        %889 = vperm.xlu0 %888, %v846
        %v890 = vpop.permute.xlu0 %889
        %891 = vset.pattern.permute.xlu0 0
        %892 = vperm.xlu0 %891, %v847
        %v893 = vpop.permute.xlu0 %892
        %894 = vset.pattern.permute.xlu0 0
        %895 = vperm.xlu0 %894, %v848
        %v896 = vpop.permute.xlu0 %895
        %897 = vset.pattern.permute.xlu0 0
        %898 = vperm.xlu0 %897, %v849
        %v899 = vpop.permute.xlu0 %898
        %900 = vset.pattern.permute.xlu0 0
        %901 = vperm.xlu0 %900, %v850
        %v902 = vpop.permute.xlu0 %901
        %903 = vset.pattern.permute.xlu0 0
        %904 = vperm.xlu0 %903, %v851
        %v905 = vpop.permute.xlu0 %904
        %906 = vset.pattern.permute.xlu0 0
        %907 = vperm.xlu0 %906, %v852
        %v908 = vpop.permute.xlu0 %907
        %909 = vset.pattern.permute.xlu0 0
        %910 = vperm.xlu0 %909, %v853
        %v911 = vpop.permute.xlu0 %910
        %912 = vset.pattern.permute.xlu0 0
        %913 = vperm.xlu0 %912, %v854
        %v914 = vpop.permute.xlu0 %913
        %915 = vset.pattern.permute.xlu0 0
        %916 = vperm.xlu0 %915, %v855
        %v917 = vpop.permute.xlu0 %916
        %918 = vset.pattern.permute.xlu0 0
        %919 = vperm.xlu0 %918, %v856
        %v920 = vpop.permute.xlu0 %919
        %v921 = vlaneseq
        %v922 = vand.u32 %v921, 127
        %v923 = vlaneseq
        %v924 = vshrl.u32 %v923, 7
        %v925 = vsub.s32 %v922, %v924
        %v926 = vrot.slane %v875, %v925
        %v927 = vadd.s32 %v922, 4294967288
        %v928 = vlaneseq
        %v929 = vshrl.u32 %v928, 7
        %v930 = vsub.s32 %v927, %v929
        %v931 = vrot.slane %v878, %v930
        %vm932 = vcmask 130112
        %v933 = vsel %vm932, %v931, %v926
        %v934 = vlaneseq
        %v935 = vshrl.u32 %v934, 7
        %v936 = vsub.s32 %v922, %v935
        %v937 = vrot.slane %v881, %v936
        %v938 = vlaneseq
        %v939 = vshrl.u32 %v938, 7
        %v940 = vsub.s32 %v927, %v939
        %v941 = vrot.slane %v884, %v940
        %v942 = vsel %vm932, %v941, %v937
        %v943 = vlaneseq
        %v944 = vshrl.u32 %v943, 7
        %v945 = vsub.s32 %v922, %v944
        %v946 = vrot.slane %v887, %v945
        %v947 = vlaneseq
        %v948 = vshrl.u32 %v947, 7
        %v949 = vsub.s32 %v927, %v948
        %v950 = vrot.slane %v890, %v949
        %v951 = vsel %vm932, %v950, %v946
        %v952 = vlaneseq
        %v953 = vshrl.u32 %v952, 7
        %v954 = vsub.s32 %v922, %v953
        %v955 = vrot.slane %v893, %v954
        %v956 = vlaneseq
        %v957 = vshrl.u32 %v956, 7
        %v958 = vsub.s32 %v927, %v957
        %v959 = vrot.slane %v896, %v958
        %v960 = vsel %vm932, %v959, %v955
        %v961 = vlaneseq
        %v962 = vshrl.u32 %v961, 7
        %v963 = vsub.s32 %v922, %v962
        %v964 = vrot.slane %v899, %v963
        %v965 = vlaneseq
        %v966 = vshrl.u32 %v965, 7
        %v967 = vsub.s32 %v927, %v966
        %v968 = vrot.slane %v902, %v967
        %v969 = vsel %vm932, %v968, %v964
        %v970 = vlaneseq
        %v971 = vshrl.u32 %v970, 7
        %v972 = vsub.s32 %v922, %v971
        %v973 = vrot.slane %v905, %v972
        %v974 = vlaneseq
        %v975 = vshrl.u32 %v974, 7
        %v976 = vsub.s32 %v927, %v975
        %v977 = vrot.slane %v908, %v976
        %v978 = vsel %vm932, %v977, %v973
        %v979 = vlaneseq
        %v980 = vshrl.u32 %v979, 7
        %v981 = vsub.s32 %v922, %v980
        %v982 = vrot.slane %v911, %v981
        %v983 = vlaneseq
        %v984 = vshrl.u32 %v983, 7
        %v985 = vsub.s32 %v927, %v984
        %v986 = vrot.slane %v914, %v985
        %v987 = vsel %vm932, %v986, %v982
        %v988 = vlaneseq
        %v989 = vshrl.u32 %v988, 7
        %v990 = vsub.s32 %v922, %v989
        %v991 = vrot.slane %v917, %v990
        %v992 = vlaneseq
        %v993 = vshrl.u32 %v992, 7
        %v994 = vsub.s32 %v927, %v993
        %v995 = vrot.slane %v920, %v994
        %v996 = vsel %vm932, %v995, %v991
        %vm997 = vcmask 1041409
        %v998 = vsel %vm997, %v942, %v933
        %vm999 = vcmask 1042434
        %v1000 = vsel %vm999, %v951, %v998
        %vm1001 = vcmask 1043459
        %v1002 = vsel %vm1001, %v960, %v1000
        %vm1003 = vcmask 1044484
        %v1004 = vsel %vm1003, %v969, %v1002
        %vm1005 = vcmask 1045509
        %v1006 = vsel %vm1005, %v978, %v1004
        %vm1007 = vcmask 1046534
        %v1008 = vsel %vm1007, %v987, %v1006
        %vm1009 = vcmask 1047559
        %v1010 = vsel %vm1009, %v996, %v1008
        %vm1012 = vcmask 130048
        %v1013 = vsel %vm1012, %v1010, -inf
        %1014 = vmax.xlane.f32.xlu0 %v1013
        %v1015 = vpop.xlane.xlu0 %1014
        %v1017 = vlaneseq
        %v1018 = vshrl.u32 %v1017, 7
        %v1019 = vsub.s32 0, %v1018
        %v1020 = vrot.slane %v1015, %v1019
        %v1021 = vlaneseq
        %v1022 = vshrl.u32 %v1021, 7
        %v1023 = vsub.s32 1, %v1022
        %v1024 = vrot.slane %v1015, %v1023
        %v1025 = vlaneseq
        %v1026 = vshrl.u32 %v1025, 7
        %v1027 = vsub.s32 2, %v1026
        %v1028 = vrot.slane %v1015, %v1027
        %v1029 = vlaneseq
        %v1030 = vshrl.u32 %v1029, 7
        %v1031 = vsub.s32 3, %v1030
        %v1032 = vrot.slane %v1015, %v1031
        %v1033 = vlaneseq
        %v1034 = vshrl.u32 %v1033, 7
        %v1035 = vsub.s32 4, %v1034
        %v1036 = vrot.slane %v1015, %v1035
        %v1037 = vlaneseq
        %v1038 = vshrl.u32 %v1037, 7
        %v1039 = vsub.s32 5, %v1038
        %v1040 = vrot.slane %v1015, %v1039
        %v1041 = vlaneseq
        %v1042 = vshrl.u32 %v1041, 7
        %v1043 = vsub.s32 6, %v1042
        %v1044 = vrot.slane %v1015, %v1043
        %v1045 = vlaneseq
        %v1046 = vshrl.u32 %v1045, 7
        %v1047 = vsub.s32 7, %v1046
        %v1048 = vrot.slane %v1015, %v1047
        %v1057 = vsub.f32 %v841, %v1020
        %v1058 = vsub.f32 %v842, %v1020
        %v1059 = vsub.f32 %v843, %v1024
        %v1060 = vsub.f32 %v844, %v1024
        %v1061 = vsub.f32 %v845, %v1028
        %v1062 = vsub.f32 %v846, %v1028
        %v1063 = vsub.f32 %v847, %v1032
        %v1064 = vsub.f32 %v848, %v1032
        %v1065 = vsub.f32 %v849, %v1036
        %v1066 = vsub.f32 %v850, %v1036
        %v1067 = vsub.f32 %v851, %v1040
        %v1068 = vsub.f32 %v852, %v1040
        %v1069 = vsub.f32 %v853, %v1044
        %v1070 = vsub.f32 %v854, %v1044
        %v1071 = vsub.f32 %v855, %v1048
        %v1072 = vsub.f32 %v856, %v1048
        %v1073 = vmul.f32 %v1057, 1.442695
        %v1074 = vpow.pop %v1073
        %v1075 = vmul.f32 %v1058, 1.442695
        %v1076 = vpow.pop %v1075
        %v1077 = vmul.f32 %v1059, 1.442695
        %v1078 = vpow.pop %v1077
        %v1079 = vmul.f32 %v1060, 1.442695
        %v1080 = vpow.pop %v1079
        %v1081 = vmul.f32 %v1061, 1.442695
        %v1082 = vpow.pop %v1081
        %v1083 = vmul.f32 %v1062, 1.442695
        %v1084 = vpow.pop %v1083
        %v1085 = vmul.f32 %v1063, 1.442695
        %v1086 = vpow.pop %v1085
        %v1087 = vmul.f32 %v1064, 1.442695
        %v1088 = vpow.pop %v1087
        %v1089 = vmul.f32 %v1065, 1.442695
        %v1090 = vpow.pop %v1089
        %v1091 = vmul.f32 %v1066, 1.442695
        %v1092 = vpow.pop %v1091
        %v1093 = vmul.f32 %v1067, 1.442695
        %v1094 = vpow.pop %v1093
        %v1095 = vmul.f32 %v1068, 1.442695
        %v1096 = vpow.pop %v1095
        %v1097 = vmul.f32 %v1069, 1.442695
        %v1098 = vpow.pop %v1097
        %v1099 = vmul.f32 %v1070, 1.442695
        %v1100 = vpow.pop %v1099
        %v1101 = vmul.f32 %v1071, 1.442695
        %v1102 = vpow.pop %v1101
        %v1103 = vmul.f32 %v1072, 1.442695
        %v1104 = vpow.pop %v1103
        %1121 = vset.pattern.permute.xlu0 0
        %1122 = vperm.xlu0 %1121, %v1074
        %v1123 = vpop.permute.xlu0 %1122
        %1124 = vset.pattern.permute.xlu0 0
        %1125 = vperm.xlu0 %1124, %v1076
        %v1126 = vpop.permute.xlu0 %1125
        %1127 = vset.pattern.permute.xlu0 0
        %1128 = vperm.xlu0 %1127, %v1078
        %v1129 = vpop.permute.xlu0 %1128
        %1130 = vset.pattern.permute.xlu0 0
        %1131 = vperm.xlu0 %1130, %v1080
        %v1132 = vpop.permute.xlu0 %1131
        %1133 = vset.pattern.permute.xlu0 0
        %1134 = vperm.xlu0 %1133, %v1082
        %v1135 = vpop.permute.xlu0 %1134
        %1136 = vset.pattern.permute.xlu0 0
        %1137 = vperm.xlu0 %1136, %v1084
        %v1138 = vpop.permute.xlu0 %1137
        %1139 = vset.pattern.permute.xlu0 0
        %1140 = vperm.xlu0 %1139, %v1086
        %v1141 = vpop.permute.xlu0 %1140
        %1142 = vset.pattern.permute.xlu0 0
        %1143 = vperm.xlu0 %1142, %v1088
        %v1144 = vpop.permute.xlu0 %1143
        %1145 = vset.pattern.permute.xlu0 0
        %1146 = vperm.xlu0 %1145, %v1090
        %v1147 = vpop.permute.xlu0 %1146
        %1148 = vset.pattern.permute.xlu0 0
        %1149 = vperm.xlu0 %1148, %v1092
        %v1150 = vpop.permute.xlu0 %1149
        %1151 = vset.pattern.permute.xlu0 0
        %1152 = vperm.xlu0 %1151, %v1094
        %v1153 = vpop.permute.xlu0 %1152
        %1154 = vset.pattern.permute.xlu0 0
        %1155 = vperm.xlu0 %1154, %v1096
        %v1156 = vpop.permute.xlu0 %1155
        %1157 = vset.pattern.permute.xlu0 0
        %1158 = vperm.xlu0 %1157, %v1098
        %v1159 = vpop.permute.xlu0 %1158
        %1160 = vset.pattern.permute.xlu0 0
        %1161 = vperm.xlu0 %1160, %v1100
        %v1162 = vpop.permute.xlu0 %1161
        %1163 = vset.pattern.permute.xlu0 0
        %1164 = vperm.xlu0 %1163, %v1102
        %v1165 = vpop.permute.xlu0 %1164
        %1166 = vset.pattern.permute.xlu0 0
        %1167 = vperm.xlu0 %1166, %v1104
        %v1168 = vpop.permute.xlu0 %1167
        %v1169 = vlaneseq
        %v1170 = vshrl.u32 %v1169, 7
        %v1171 = vsub.s32 %v922, %v1170
        %v1172 = vrot.slane %v1123, %v1171
        %v1173 = vlaneseq
        %v1174 = vshrl.u32 %v1173, 7
        %v1175 = vsub.s32 %v927, %v1174
        %v1176 = vrot.slane %v1126, %v1175
        %v1177 = vsel %vm932, %v1176, %v1172
        %v1178 = vlaneseq
        %v1179 = vshrl.u32 %v1178, 7
        %v1180 = vsub.s32 %v922, %v1179
        %v1181 = vrot.slane %v1129, %v1180
        %v1182 = vlaneseq
        %v1183 = vshrl.u32 %v1182, 7
        %v1184 = vsub.s32 %v927, %v1183
        %v1185 = vrot.slane %v1132, %v1184
        %v1186 = vsel %vm932, %v1185, %v1181
        %v1187 = vlaneseq
        %v1188 = vshrl.u32 %v1187, 7
        %v1189 = vsub.s32 %v922, %v1188
        %v1190 = vrot.slane %v1135, %v1189
        %v1191 = vlaneseq
        %v1192 = vshrl.u32 %v1191, 7
        %v1193 = vsub.s32 %v927, %v1192
        %v1194 = vrot.slane %v1138, %v1193
        %v1195 = vsel %vm932, %v1194, %v1190
        %v1196 = vlaneseq
        %v1197 = vshrl.u32 %v1196, 7
        %v1198 = vsub.s32 %v922, %v1197
        %v1199 = vrot.slane %v1141, %v1198
        %v1200 = vlaneseq
        %v1201 = vshrl.u32 %v1200, 7
        %v1202 = vsub.s32 %v927, %v1201
        %v1203 = vrot.slane %v1144, %v1202
        %v1204 = vsel %vm932, %v1203, %v1199
        %v1205 = vlaneseq
        %v1206 = vshrl.u32 %v1205, 7
        %v1207 = vsub.s32 %v922, %v1206
        %v1208 = vrot.slane %v1147, %v1207
        %v1209 = vlaneseq
        %v1210 = vshrl.u32 %v1209, 7
        %v1211 = vsub.s32 %v927, %v1210
        %v1212 = vrot.slane %v1150, %v1211
        %v1213 = vsel %vm932, %v1212, %v1208
        %v1214 = vlaneseq
        %v1215 = vshrl.u32 %v1214, 7
        %v1216 = vsub.s32 %v922, %v1215
        %v1217 = vrot.slane %v1153, %v1216
        %v1218 = vlaneseq
        %v1219 = vshrl.u32 %v1218, 7
        %v1220 = vsub.s32 %v927, %v1219
        %v1221 = vrot.slane %v1156, %v1220
        %v1222 = vsel %vm932, %v1221, %v1217
        %v1223 = vlaneseq
        %v1224 = vshrl.u32 %v1223, 7
        %v1225 = vsub.s32 %v922, %v1224
        %v1226 = vrot.slane %v1159, %v1225
        %v1227 = vlaneseq
        %v1228 = vshrl.u32 %v1227, 7
        %v1229 = vsub.s32 %v927, %v1228
        %v1230 = vrot.slane %v1162, %v1229
        %v1231 = vsel %vm932, %v1230, %v1226
        %v1232 = vlaneseq
        %v1233 = vshrl.u32 %v1232, 7
        %v1234 = vsub.s32 %v922, %v1233
        %v1235 = vrot.slane %v1165, %v1234
        %v1236 = vlaneseq
        %v1237 = vshrl.u32 %v1236, 7
        %v1238 = vsub.s32 %v927, %v1237
        %v1239 = vrot.slane %v1168, %v1238
        %v1240 = vsel %vm932, %v1239, %v1235
        %v1241 = vsel %vm997, %v1186, %v1177
        %v1242 = vsel %vm999, %v1195, %v1241
        %v1243 = vsel %vm1001, %v1204, %v1242
        %v1244 = vsel %vm1003, %v1213, %v1243
        %v1245 = vsel %vm1005, %v1222, %v1244
        %v1246 = vsel %vm1007, %v1231, %v1245
        %v1247 = vsel %vm1009, %v1240, %v1246
        %v1249 = vsel %vm1012, %v1247, 0.0
        %1250 = vadd.xlane.f32.xlu0 %v1249
        %v1251 = vpop.xlane.xlu0 %1250
        %v1252 = vrcp.pop %v1251
        %v1254 = vlaneseq
        %v1255 = vshrl.u32 %v1254, 7
        %v1256 = vsub.s32 0, %v1255
        %v1257 = vrot.slane %v1252, %v1256
        %v1258 = vlaneseq
        %v1259 = vshrl.u32 %v1258, 7
        %v1260 = vsub.s32 1, %v1259
        %v1261 = vrot.slane %v1252, %v1260
        %v1262 = vlaneseq
        %v1263 = vshrl.u32 %v1262, 7
        %v1264 = vsub.s32 2, %v1263
        %v1265 = vrot.slane %v1252, %v1264
        %v1266 = vlaneseq
        %v1267 = vshrl.u32 %v1266, 7
        %v1268 = vsub.s32 3, %v1267
        %v1269 = vrot.slane %v1252, %v1268
        %v1270 = vlaneseq
        %v1271 = vshrl.u32 %v1270, 7
        %v1272 = vsub.s32 4, %v1271
        %v1273 = vrot.slane %v1252, %v1272
        %v1274 = vlaneseq
        %v1275 = vshrl.u32 %v1274, 7
        %v1276 = vsub.s32 5, %v1275
        %v1277 = vrot.slane %v1252, %v1276
        %v1278 = vlaneseq
        %v1279 = vshrl.u32 %v1278, 7
        %v1280 = vsub.s32 6, %v1279
        %v1281 = vrot.slane %v1252, %v1280
        %v1282 = vlaneseq
        %v1283 = vshrl.u32 %v1282, 7
        %v1284 = vsub.s32 7, %v1283
        %v1285 = vrot.slane %v1252, %v1284
        %v1294 = vmul.f32 %v1074, %v1257
        %v1295 = vmul.f32 %v1076, %v1257
        %v1296 = vmul.f32 %v1078, %v1261
        %v1297 = vmul.f32 %v1080, %v1261
        %v1298 = vmul.f32 %v1082, %v1265
        %v1299 = vmul.f32 %v1084, %v1265
        %v1300 = vmul.f32 %v1086, %v1269
        %v1301 = vmul.f32 %v1088, %v1269
        %v1302 = vmul.f32 %v1090, %v1273
        %v1303 = vmul.f32 %v1092, %v1273
        %v1304 = vmul.f32 %v1094, %v1277
        %v1305 = vmul.f32 %v1096, %v1277
        %v1306 = vmul.f32 %v1098, %v1281
        %v1307 = vmul.f32 %v1100, %v1281
        %v1308 = vmul.f32 %v1102, %v1285
        %v1309 = vmul.f32 %v1104, %v1285
        %1326 = vset.pattern.permute.xlu0 0
        %1327 = vperm.xlu0 %1326, %v1294
        %v1328 = vpop.permute.xlu0 %1327
        %1329 = vset.pattern.permute.xlu0 0
        %1330 = vperm.xlu0 %1329, %v1295
        %v1331 = vpop.permute.xlu0 %1330
        %1332 = vset.pattern.permute.xlu0 0
        %1333 = vperm.xlu0 %1332, %v1296
        %v1334 = vpop.permute.xlu0 %1333
        %1335 = vset.pattern.permute.xlu0 0
        %1336 = vperm.xlu0 %1335, %v1297
        %v1337 = vpop.permute.xlu0 %1336
        %1338 = vset.pattern.permute.xlu0 0
        %1339 = vperm.xlu0 %1338, %v1298
        %v1340 = vpop.permute.xlu0 %1339
        %1341 = vset.pattern.permute.xlu0 0
        %1342 = vperm.xlu0 %1341, %v1299
        %v1343 = vpop.permute.xlu0 %1342
        %1344 = vset.pattern.permute.xlu0 0
        %1345 = vperm.xlu0 %1344, %v1300
        %v1346 = vpop.permute.xlu0 %1345
        %1347 = vset.pattern.permute.xlu0 0
        %1348 = vperm.xlu0 %1347, %v1301
        %v1349 = vpop.permute.xlu0 %1348
        %1350 = vset.pattern.permute.xlu0 0
        %1351 = vperm.xlu0 %1350, %v1302
        %v1352 = vpop.permute.xlu0 %1351
        %1353 = vset.pattern.permute.xlu0 0
        %1354 = vperm.xlu0 %1353, %v1303
        %v1355 = vpop.permute.xlu0 %1354
        %1356 = vset.pattern.permute.xlu0 0
        %1357 = vperm.xlu0 %1356, %v1304
        %v1358 = vpop.permute.xlu0 %1357
        %1359 = vset.pattern.permute.xlu0 0
        %1360 = vperm.xlu0 %1359, %v1305
        %v1361 = vpop.permute.xlu0 %1360
        %1362 = vset.pattern.permute.xlu0 0
        %1363 = vperm.xlu0 %1362, %v1306
        %v1364 = vpop.permute.xlu0 %1363
        %1365 = vset.pattern.permute.xlu0 0
        %1366 = vperm.xlu0 %1365, %v1307
        %v1367 = vpop.permute.xlu0 %1366
        %1368 = vset.pattern.permute.xlu0 0
        %1369 = vperm.xlu0 %1368, %v1308
        %v1370 = vpop.permute.xlu0 %1369
        %1371 = vset.pattern.permute.xlu0 0
        %1372 = vperm.xlu0 %1371, %v1309
        %v1373 = vpop.permute.xlu0 %1372
        %v1374 = vlaneseq
        %v1375 = vshrl.u32 %v1374, 7
        %v1376 = vsub.s32 %v922, %v1375
        %v1377 = vrot.slane %v1328, %v1376
        %v1378 = vlaneseq
        %v1379 = vshrl.u32 %v1378, 7
        %v1380 = vsub.s32 %v927, %v1379
        %v1381 = vrot.slane %v1331, %v1380
        %v1382 = vsel %vm932, %v1381, %v1377
        %v1383 = vlaneseq
        %v1384 = vshrl.u32 %v1383, 7
        %v1385 = vsub.s32 %v922, %v1384
        %v1386 = vrot.slane %v1334, %v1385
        %v1387 = vlaneseq
        %v1388 = vshrl.u32 %v1387, 7
        %v1389 = vsub.s32 %v927, %v1388
        %v1390 = vrot.slane %v1337, %v1389
        %v1391 = vsel %vm932, %v1390, %v1386
        %v1392 = vlaneseq
        %v1393 = vshrl.u32 %v1392, 7
        %v1394 = vsub.s32 %v922, %v1393
        %v1395 = vrot.slane %v1340, %v1394
        %v1396 = vlaneseq
        %v1397 = vshrl.u32 %v1396, 7
        %v1398 = vsub.s32 %v927, %v1397
        %v1399 = vrot.slane %v1343, %v1398
        %v1400 = vsel %vm932, %v1399, %v1395
        %v1401 = vlaneseq
        %v1402 = vshrl.u32 %v1401, 7
        %v1403 = vsub.s32 %v922, %v1402
        %v1404 = vrot.slane %v1346, %v1403
        %v1405 = vlaneseq
        %v1406 = vshrl.u32 %v1405, 7
        %v1407 = vsub.s32 %v927, %v1406
        %v1408 = vrot.slane %v1349, %v1407
        %v1409 = vsel %vm932, %v1408, %v1404
        %v1410 = vlaneseq
        %v1411 = vshrl.u32 %v1410, 7
        %v1412 = vsub.s32 %v922, %v1411
        %v1413 = vrot.slane %v1352, %v1412
        %v1414 = vlaneseq
        %v1415 = vshrl.u32 %v1414, 7
        %v1416 = vsub.s32 %v927, %v1415
        %v1417 = vrot.slane %v1355, %v1416
        %v1418 = vsel %vm932, %v1417, %v1413
        %v1419 = vlaneseq
        %v1420 = vshrl.u32 %v1419, 7
        %v1421 = vsub.s32 %v922, %v1420
        %v1422 = vrot.slane %v1358, %v1421
        %v1423 = vlaneseq
        %v1424 = vshrl.u32 %v1423, 7
        %v1425 = vsub.s32 %v927, %v1424
        %v1426 = vrot.slane %v1361, %v1425
        %v1427 = vsel %vm932, %v1426, %v1422
        %v1428 = vlaneseq
        %v1429 = vshrl.u32 %v1428, 7
        %v1430 = vsub.s32 %v922, %v1429
        %v1431 = vrot.slane %v1364, %v1430
        %v1432 = vlaneseq
        %v1433 = vshrl.u32 %v1432, 7
        %v1434 = vsub.s32 %v927, %v1433
        %v1435 = vrot.slane %v1367, %v1434
        %v1436 = vsel %vm932, %v1435, %v1431
        %v1437 = vlaneseq
        %v1438 = vshrl.u32 %v1437, 7
        %v1439 = vsub.s32 %v922, %v1438
        %v1440 = vrot.slane %v1370, %v1439
        %v1441 = vlaneseq
        %v1442 = vshrl.u32 %v1441, 7
        %v1443 = vsub.s32 %v927, %v1442
        %v1444 = vrot.slane %v1373, %v1443
        %v1445 = vsel %vm932, %v1444, %v1440
        %v1446 = vsel %vm997, %v1391, %v1382
        %v1447 = vsel %vm999, %v1400, %v1446
        %v1448 = vsel %vm1001, %v1409, %v1447
        %v1449 = vsel %vm1003, %v1418, %v1448
        %v1450 = vsel %vm1005, %v1427, %v1449
        %v1451 = vsel %vm1007, %v1436, %v1450
        %v1452 = vsel %vm1009, %v1445, %v1451
        %1454 = vst.msk [vmem:[%s329] sm:$0xff] %vm1012, %v1452
        %s1455 = sand.u32 %s154, 1
        %s1456 = scalar_lea.sflag [#allocation4], %s1455
        %s1457 = sand.u32 %s154, 1
        %s1458 = smul.addr %s1457, 8
        %s1459 = scalar_lea.vmem [#allocation10], %s1458
        // Predicated region
        $region57: #{tpu_custom_call.1} parent=39 // pred_check
          %p1460 = pneg %p164
        $region58: #{tpu_custom_call.1} parent=39 // pred_check_branch
          %1462 = sbr.rel (%p1460) target = $region60
        $region59: #{tpu_custom_call.1} parent=39 // pred_region
          %s1464 = ssub.s32 128, 128
          %1465 = vsyncadd %s1456, %s1464
          %s1466 = smul.addr %s26, 128
          %s1467 = scalar_lea.hbm %s5, %s1466
          %s1469 = sshll.u32 %s1459, 4
          %s1470 = int_to_ptr.vmem [resolvable:$true] %s1469
          %1472 = dma.vmem_to_hbm [thread:$0]  %s1470, 128, %s1467, %s1456
        $region60: #{tpu_custom_call.1} parent=39 // pred_fallthru
          _
      $region40: #{tpu_custom_call.1} parent=5 // pred_fallthru
        _
      %p1473 = scmp.le.s32.totalorder 2, %s21
      // Predicated region
      $region61: #{tpu_custom_call.1} parent=5 // pred_check
        %p1474 = pneg %p1473
      $region62: #{tpu_custom_call.1} parent=5 // pred_check_branch
        %1476 = sbr.rel (%p1474) target = $region64
      $region63: #{tpu_custom_call.1} parent=5 // pred_region
        %s1477 = ssub.s32 %s21, 2
        // Predicated region
        $region65: #{tpu_custom_call.1} parent=63 // pred_check
          %p1478 = pneg %p170
        $region66: #{tpu_custom_call.1} parent=63 // pred_check_branch
          %1480 = sbr.rel (%p1478) target = $region68
        $region67: #{tpu_custom_call.1} parent=63 // pred_region
          %s1481 = sand.u32 %s155, 1
          %s1482 = scalar_lea.sflag [#allocation4], %s1481
          %s1483 = sand.u32 %s155, 1
          %s1484 = smul.addr %s1483, 8
          %s1485 = scalar_lea.vmem [#allocation10], %s1484
          %1486 = dma.done %s1482, 128
        $region68: #{tpu_custom_call.1} parent=63 // pred_fallthru
          _
      $region64: #{tpu_custom_call.1} parent=5 // pred_fallthru
        _
    $region6: #{tpu_custom_call.1} parent=1 // loop_footer
      %s25 = sadd.s32 1, %s21
    $region7: #{tpu_custom_call.1} parent=1 // loop_footer_branch
      %20 = sbr.rel target = $region3
    $region8: #{tpu_custom_call.1} parent=1 // loop_exit
      _
    %1487 = vsyncpa [#allocation3], 1
    %s1488 = scalar_lea.sflag [#allocation3], 1
    %1489 = vsyncpa %s1488, 1
    %1490 = vsyncpa [#allocation6], 1
    %s1491 = scalar_lea.sflag [#allocation6], 1
    %1492 = vsyncpa %s1491, 1
    %1493 = vsyncpa [#allocation9], 1
    %1494 = vsyncpa [#allocation4], 1
    %s1495 = scalar_lea.sflag [#allocation4], 1
    %1496 = vsyncpa %s1495, 1

</llo_original>
